<compile_context>
chip_gen: v7x
topology: tpu7x:2x2x1
jax: 0.10.0
libtpu: 0.0.40
codegen_flags: <defaults>
</compile_context>

<pallas_src>
import jax
import jax.numpy as jnp
from jax.experimental import pallas as pl
from jax.experimental.pallas import tpu as pltpu

# ----- problem sizes (small, consistent with the module) -----
B, V, C, H, W = 2, 4, 3, 16, 16          # batch, views, channels, spatial
FEAT_DIM = 128                            # feat_dim (512 in torch default; small here)
K_IN = C * H * W                          # 768 flattened per-view pixels
LN_EPS = 1e-5                             # PyTorch LayerNorm default eps
N_OFF, N_ACT = 4, 8                       # fc_offence / fc_action output widths
OUT_ROWS = 8                              # logits slab padded to a full f32 sublane tile


# --------------------------------------------------------------------------
# Fused kernel: backbone projection + view-max pooling + all three heads
# --------------------------------------------------------------------------
def _normalize(x):
    mu = jnp.mean(x, axis=-1, keepdims=True)
    var = jnp.mean((x - mu) ** 2, axis=-1, keepdims=True)
    return (x - mu) * jax.lax.rsqrt(var + LN_EPS)


def fused_kernel(x_ref, wbb_ref, wmlp_ref, w2_ref, bias_ref,
                 feats_ref, logits_ref):
    D = FEAT_DIM

    # ---- synthetic backbone: per-view dense projection (bf16 operands, f32 acc).
    #      bf16 cast happens here, not in the wrapper (no extra XLA convert launch).
    x = x_ref[...].astype(jnp.bfloat16)                              # (B*V, K_IN)
    feats = jnp.dot(x, wbb_ref[...],
                    preferred_element_type=jnp.float32)              # (B*V, D) f32
    feats = feats + bias_ref[0:1, 0:D]
    feats_ref[...] = feats

    # ---- ViewMaxAggregate: max over the V views of each batch element
    pooled = jnp.max(feats.reshape(B, V, D), axis=1)                 # (B, D) f32

    # ---- inter head: LayerNorm (affine folded into W) -> Linear -> ReLU -> Linear
    nrm = _normalize(pooled)
    h = jnp.dot(nrm.astype(jnp.bfloat16), wmlp_ref[:, 0:D],
                preferred_element_type=jnp.float32) + bias_ref[1:2, 0:D]
    h = jnp.maximum(h, 0.0)
    inter = jnp.dot(h.astype(jnp.bfloat16), wmlp_ref[:, D:2 * D],
                    preferred_element_type=jnp.float32) + bias_ref[1:2, D:2 * D]

    # ---- fc_offence + fc_action, layer-1 fused into one (B,D)x(D,2D) dot
    nrm2 = _normalize(inter)
    h2 = jnp.dot(nrm2.astype(jnp.bfloat16), wmlp_ref[:, 2 * D:4 * D],
                 preferred_element_type=jnp.float32) + bias_ref[2:3, :]
    h2 = jnp.maximum(h2, 0.0)                                        # (B, 2D) f32

    # ---- layer-2 fused via block-diagonal (2D, D) weight; cols 0:4 = offence,
    #      cols 4:12 = action, remaining lanes are exact zeros (padding).
    logits = jnp.dot(h2.astype(jnp.bfloat16), w2_ref[...],
                     preferred_element_type=jnp.float32) + bias_ref[3:4, 0:D]

    # pad to a full (8,128) sublane tile -> unmasked aligned store
    logits_ref[...] = jnp.concatenate(
        [logits, jnp.zeros((OUT_ROWS - B, D), jnp.float32)], axis=0)


def mv_aggregate_forward(mvimages, packed):
    x = mvimages.reshape(B * V, K_IN)         # stays f32; bf16 cast is done in-kernel
    vmem = lambda: pl.BlockSpec(memory_space=pltpu.MemorySpace.VMEM)

    in_arrays = (x, packed["w_bb"], packed["wmlp"], packed["w2"], packed["bias"])
    bytes_accessed = int(
        sum(int(a.size) * a.dtype.itemsize for a in in_arrays)
        + (B * V) * FEAT_DIM * 4 + OUT_ROWS * FEAT_DIM * 4)
    flops = int(2 * (B * V) * K_IN * FEAT_DIM            # backbone
                + 2 * B * FEAT_DIM * FEAT_DIM * 2        # inter l1 + l2
                + 2 * B * FEAT_DIM * (2 * FEAT_DIM)      # offence/action l1 (fused)
                + 2 * B * (2 * FEAT_DIM) * FEAT_DIM)     # block-diag l2

    feats, logits = pl.pallas_call(
        fused_kernel,
        out_shape=(jax.ShapeDtypeStruct((B * V, FEAT_DIM), jnp.float32),
                   jax.ShapeDtypeStruct((OUT_ROWS, FEAT_DIM), jnp.float32)),
        in_specs=[vmem() for _ in range(5)],
        out_specs=(vmem(), vmem()),
        cost_estimate=pl.CostEstimate(flops=flops, transcendentals=2 * B,
                                      bytes_accessed=bytes_accessed),
    )(*in_arrays)

    pred_offence = logits[0:B, 0:N_OFF]               # (B, 4)
    pred_action = logits[0:B, N_OFF:N_OFF + N_ACT]    # (B, 8)
    attention = feats.reshape(B, V, FEAT_DIM)         # `aux` of ViewMaxAggregate
    # MVAggregate returns (pred_offence_severity, pred_action, attention)
    return pred_offence, pred_action, attention


# --------------------------------------------------------------------------
# Host-side parameter packing (lane-dense bf16 slabs, LN affine folded into Linear)
# --------------------------------------------------------------------------
def pack_params(p):
    D = FEAT_DIM

    def fold(gamma, beta, w1, b1):
        # (nrm * g + b) @ W + c  ==  nrm @ (g[:,None] * W) + (c + b @ W)
        return gamma.reshape(D, 1) * w1, b1 + beta @ w1

    w_i1f, b_i1f = fold(p["gi"], p["bi"], p["wi1"], p["bi1"])
    wo1f, bo1f = fold(p["go"], p["bo"], p["wo1"], p["bo1"])
    wa1f, ba1f = fold(p["ga"], p["ba"], p["wa1"], p["ba1"])

    # layer-1 weight slab: [inter_l1 | inter_l2 | offence_l1 | action_l1]
    wmlp = jnp.concatenate([w_i1f, p["wi2"], wo1f, wa1f], axis=1)   # (D, 4D)

    # block-diagonal layer-2 weight for the offence/action heads
    w2 = jnp.zeros((2 * D, D), jnp.float32)
    w2 = w2.at[0:D, 0:N_OFF].set(p["wo2"])
    w2 = w2.at[D:2 * D, N_OFF:N_OFF + N_ACT].set(p["wa2"])

    b2 = jnp.zeros((1, D), jnp.float32)
    b2 = b2.at[:, 0:N_OFF].set(p["bo2"])
    b2 = b2.at[:, N_OFF:N_OFF + N_ACT].set(p["ba2"])

    # the wrapper only reads logits lanes 0:12, but these must stay exact zeros
    assert bool(jnp.all(w2[:, N_OFF + N_ACT:] == 0.0))
    assert bool(jnp.all(b2[:, N_OFF + N_ACT:] == 0.0))

    z = jnp.zeros((1, D), jnp.float32)
    bias = jnp.concatenate([
        jnp.concatenate([p["b_bb"], z], axis=1),        # row 0: backbone bias
        jnp.concatenate([b_i1f, p["bi2"]], axis=1),     # row 1: inter l1 / l2 biases
        jnp.concatenate([bo1f, ba1f], axis=1),          # row 2: offence/action l1 biases
        jnp.concatenate([b2, z], axis=1),               # row 3: [bo2 | ba2 | 0] padded
    ], axis=0)                                          # (4, 2D) f32

    return {
        "w_bb": p["w_bb"].astype(jnp.bfloat16),         # bf16 MXU operands
        "wmlp": wmlp.astype(jnp.bfloat16),
        "w2": w2.astype(jnp.bfloat16),
        "bias": bias,                                   # biases stay f32 (VPU adds)
    }


# --------------------------------------------------------------------------
# Deterministic parameter init (synthetic; not a checkpoint load)
# --------------------------------------------------------------------------
def init_params(key):
    ks = jax.random.split(key, 10)
    scale = 0.05
    return {
        "w_bb": scale * jax.random.normal(ks[0], (K_IN, FEAT_DIM), jnp.float32),
        "b_bb": scale * jax.random.normal(ks[1], (1, FEAT_DIM), jnp.float32),
        # inter: LayerNorm(D) -> Linear(D,D) -> ReLU -> Linear(D,D)
        "gi": jnp.ones((1, FEAT_DIM), jnp.float32),
        "bi": jnp.zeros((1, FEAT_DIM), jnp.float32),
        "wi1": scale * jax.random.normal(ks[2], (FEAT_DIM, FEAT_DIM), jnp.float32),
        "bi1": scale * jax.random.normal(ks[3], (1, FEAT_DIM), jnp.float32),
        "wi2": scale * jax.random.normal(ks[4], (FEAT_DIM, FEAT_DIM), jnp.float32),
        "bi2": scale * jax.random.normal(ks[5], (1, FEAT_DIM), jnp.float32),
        # fc_offence: LayerNorm(D) -> Linear(D,D) -> ReLU -> Linear(D,4)
        "go": jnp.ones((1, FEAT_DIM), jnp.float32),
        "bo": jnp.zeros((1, FEAT_DIM), jnp.float32),
        "wo1": scale * jax.random.normal(ks[6], (FEAT_DIM, FEAT_DIM), jnp.float32),
        "bo1": jnp.zeros((1, FEAT_DIM), jnp.float32),
        "wo2": scale * jax.random.normal(ks[7], (FEAT_DIM, N_OFF), jnp.float32),
        "bo2": jnp.zeros((1, N_OFF), jnp.float32),
        # fc_action: LayerNorm(D) -> Linear(D,D) -> ReLU -> Linear(D,8)
        "ga": jnp.ones((1, FEAT_DIM), jnp.float32),
        "ba": jnp.zeros((1, FEAT_DIM), jnp.float32),
        "wa1": scale * jax.random.normal(ks[8], (FEAT_DIM, FEAT_DIM), jnp.float32),
        "ba1": jnp.zeros((1, FEAT_DIM), jnp.float32),
        "wa2": scale * jax.random.normal(ks[9], (FEAT_DIM, N_ACT), jnp.float32),
        "ba2": jnp.zeros((1, N_ACT), jnp.float32),
    }


# --------------------------------------------------------------------------
# Pure-JAX reference (unfused, per-head math; same bf16 dot operands as kernel)
# --------------------------------------------------------------------------
def reference_forward(mvimages, p):
    def bdot(a, w):
        return jnp.dot(a.astype(jnp.bfloat16), w.astype(jnp.bfloat16),
                       preferred_element_type=jnp.float32)

    x = mvimages.reshape(B * V, K_IN)
    feats = bdot(x, p["w_bb"]) + p["b_bb"]
    feats = feats.reshape(B, V, FEAT_DIM)
    pooled = jnp.max(feats, axis=1)

    def ln(x, g, b):
        mu = x.mean(-1, keepdims=True)
        var = ((x - mu) ** 2).mean(-1, keepdims=True)
        return (x - mu) / jnp.sqrt(var + LN_EPS) * g + b

    def head(x, g, b, w1, b1, w2, b2):
        h = jnp.maximum(bdot(ln(x, g, b), w1) + b1, 0.0)
        return bdot(h, w2) + b2

    inter = head(pooled, p["gi"], p["bi"], p["wi1"], p["bi1"], p["wi2"], p["bi2"])
    off = head(inter, p["go"], p["bo"], p["wo1"], p["bo1"], p["wo2"], p["bo2"])
    act = head(inter, p["ga"], p["ba"], p["wa1"], p["ba1"], p["wa2"], p["ba2"])
    return off, act, feats


if __name__ == "__main__":
    key = jax.random.PRNGKey(0)
    k_x, k_p = jax.random.split(key)
    mvimages = jax.random.normal(k_x, (B, V, C, H, W), jnp.float32)
    params = init_params(k_p)
    packed = pack_params(params)

    off, act, attn = mv_aggregate_forward(mvimages, packed)
    jax.block_until_ready((off, act, attn))

    off_r, act_r, attn_r = reference_forward(mvimages, params)
    assert off.shape == (B, N_OFF) and act.shape == (B, N_ACT)
    assert attn.shape == (B, V, FEAT_DIM)
    assert jnp.allclose(attn, attn_r, atol=1e-3, rtol=1e-3)
    assert jnp.allclose(off, off_r, atol=1e-3, rtol=1e-3)
    assert jnp.allclose(act, act_r, atol=1e-3, rtol=1e-3)

    print("KERNEL_OK")
</pallas_src>

<mosaic_0001>
module attributes {stable_mosaic.version = 11 : i64} {
  func.func @fused_kernel(%arg0: memref<8x768xf32, #tpu.memory_space<vmem>>, %arg1: memref<768x128xbf16, #tpu.memory_space<vmem>>, %arg2: memref<128x512xbf16, #tpu.memory_space<vmem>>, %arg3: memref<256x128xbf16, #tpu.memory_space<vmem>>, %arg4: memref<4x256xf32, #tpu.memory_space<vmem>>, %arg5: memref<8x128xf32, #tpu.memory_space<vmem>>, %arg6: memref<8x128xf32, #tpu.memory_space<vmem>>) attributes {dimension_semantics = [], scalar_prefetch = 0 : i64, scratch_operands = 0 : i64, tpu.core_type = #tpu.core_type<tc>} {
    %c0 = arith.constant 0 : index
    %c0_0 = arith.constant 0 : index
    %0 = vector.load %arg0[%c0, %c0_0] : memref<8x768xf32, #tpu.memory_space<vmem>>, vector<8x768xf32>
    %1 = arith.truncf %0 : vector<8x768xf32> to vector<8x768xbf16>
    %c0_1 = arith.constant 0 : index
    %c0_2 = arith.constant 0 : index
    %2 = vector.load %arg1[%c0_1, %c0_2] : memref<768x128xbf16, #tpu.memory_space<vmem>>, vector<768x128xbf16>
    %cst = arith.constant dense<0.000000e+00> : vector<8x128xf32>
    %3 = tpu.matmul %1, %2, %cst {dimension_numbers = #tpu.dot_dimension_numbers<[1], [0], [0], [1], [0, 0, 1, 1], [], []>} : vector<8x768xbf16>, vector<768x128xbf16>, vector<8x128xf32> -> vector<8x128xf32>
    %c0_3 = arith.constant 0 : index
    %c0_4 = arith.constant 0 : index
    %4 = vector.load %arg4[%c0_3, %c0_4] : memref<4x256xf32, #tpu.memory_space<vmem>>, vector<1x128xf32>
    %5 = vector.broadcast %4 : vector<1x128xf32> to vector<8x128xf32>
    %6 = arith.addf %3, %5 : vector<8x128xf32>
    %c0_5 = arith.constant 0 : index
    %c0_6 = arith.constant 0 : index
    %7 = vector.load %arg5[%c0_5, %c0_6] : memref<8x128xf32, #tpu.memory_space<vmem>>, vector<8x128xf32>
    tpu.vector_store %arg5[%c0_5, %c0_6], %6 {strides = array<i32>} : memref<8x128xf32, #tpu.memory_space<vmem>>, vector<8x128xf32>,
    %8 = vector.shape_cast %6 : vector<8x128xf32> to vector<2x4x128xf32>
    %cst_7 = arith.constant dense<0xFF800000> : vector<2x128xf32>
    %9 = vector.multi_reduction <maximumf>, %8, %cst_7 [1] : vector<2x4x128xf32> to vector<2x128xf32>
    %cst_8 = arith.constant dense<0.000000e+00> : vector<2xf32>
    %10 = vector.multi_reduction <add>, %9, %cst_8 [1] : vector<2x128xf32> to vector<2xf32>
    %11 = vector.shape_cast %10 : vector<2xf32> to vector<2x1xf32>
    %cst_9 = arith.constant 1.280000e+02 : f32
    %12 = vector.broadcast %cst_9 : f32 to vector<2x1xf32>
    %13 = arith.divf %11, %12 : vector<2x1xf32>
    %14 = vector.broadcast %13 : vector<2x1xf32> to vector<2x128xf32>
    %15 = arith.subf %9, %14 : vector<2x128xf32>
    %16 = arith.mulf %15, %15 : vector<2x128xf32>
    %cst_10 = arith.constant dense<0.000000e+00> : vector<2xf32>
    %17 = vector.multi_reduction <add>, %16, %cst_10 [1] : vector<2x128xf32> to vector<2xf32>
    %18 = vector.shape_cast %17 : vector<2xf32> to vector<2x1xf32>
    %cst_11 = arith.constant 1.280000e+02 : f32
    %19 = vector.broadcast %cst_11 : f32 to vector<2x1xf32>
    %20 = arith.divf %18, %19 : vector<2x1xf32>
    %21 = vector.broadcast %13 : vector<2x1xf32> to vector<2x128xf32>
    %22 = arith.subf %9, %21 : vector<2x128xf32>
    %cst_12 = arith.constant 9.99999974E-6 : f32
    %23 = vector.broadcast %cst_12 : f32 to vector<2x1xf32>
    %24 = arith.addf %20, %23 : vector<2x1xf32>
    %25 = math.rsqrt %24 : vector<2x1xf32>
    %26 = vector.broadcast %25 : vector<2x1xf32> to vector<2x128xf32>
    %27 = arith.mulf %22, %26 : vector<2x128xf32>
    %28 = arith.truncf %27 : vector<2x128xf32> to vector<2x128xbf16>
    %c0_13 = arith.constant 0 : index
    %c0_14 = arith.constant 0 : index
    %29 = vector.load %arg2[%c0_13, %c0_14] : memref<128x512xbf16, #tpu.memory_space<vmem>>, vector<128x128xbf16>
    %cst_15 = arith.constant dense<0.000000e+00> : vector<2x128xf32>
    %30 = tpu.matmul %28, %29, %cst_15 {dimension_numbers = #tpu.dot_dimension_numbers<[1], [0], [0], [1], [0, 0, 1, 1], [], []>} : vector<2x128xbf16>, vector<128x128xbf16>, vector<2x128xf32> -> vector<2x128xf32>
    %c1 = arith.constant 1 : index
    %c0_16 = arith.constant 0 : index
    %31 = vector.load %arg4[%c1, %c0_16] : memref<4x256xf32, #tpu.memory_space<vmem>>, vector<1x128xf32>
    %32 = vector.broadcast %31 : vector<1x128xf32> to vector<2x128xf32>
    %33 = arith.addf %30, %32 : vector<2x128xf32>
    %cst_17 = arith.constant 0.000000e+00 : f32
    %34 = vector.broadcast %cst_17 : f32 to vector<2x128xf32>
    %35 = arith.maximumf %33, %34 : vector<2x128xf32>
    %36 = arith.truncf %35 : vector<2x128xf32> to vector<2x128xbf16>
    %c0_18 = arith.constant 0 : index
    %c128 = arith.constant 128 : index
    %37 = vector.load %arg2[%c0_18, %c128] : memref<128x512xbf16, #tpu.memory_space<vmem>>, vector<128x128xbf16>
    %cst_19 = arith.constant dense<0.000000e+00> : vector<2x128xf32>
    %38 = tpu.matmul %36, %37, %cst_19 {dimension_numbers = #tpu.dot_dimension_numbers<[1], [0], [0], [1], [0, 0, 1, 1], [], []>} : vector<2x128xbf16>, vector<128x128xbf16>, vector<2x128xf32> -> vector<2x128xf32>
    %c1_20 = arith.constant 1 : index
    %c128_21 = arith.constant 128 : index
    %39 = vector.load %arg4[%c1_20, %c128_21] : memref<4x256xf32, #tpu.memory_space<vmem>>, vector<1x128xf32>
    %40 = vector.broadcast %39 : vector<1x128xf32> to vector<2x128xf32>
    %41 = arith.addf %38, %40 : vector<2x128xf32>
    %cst_22 = arith.constant dense<0.000000e+00> : vector<2xf32>
    %42 = vector.multi_reduction <add>, %41, %cst_22 [1] : vector<2x128xf32> to vector<2xf32>
    %43 = vector.shape_cast %42 : vector<2xf32> to vector<2x1xf32>
    %cst_23 = arith.constant 1.280000e+02 : f32
    %44 = vector.broadcast %cst_23 : f32 to vector<2x1xf32>
    %45 = arith.divf %43, %44 : vector<2x1xf32>
    %46 = vector.broadcast %45 : vector<2x1xf32> to vector<2x128xf32>
    %47 = arith.subf %41, %46 : vector<2x128xf32>
    %48 = arith.mulf %47, %47 : vector<2x128xf32>
    %cst_24 = arith.constant dense<0.000000e+00> : vector<2xf32>
    %49 = vector.multi_reduction <add>, %48, %cst_24 [1] : vector<2x128xf32> to vector<2xf32>
    %50 = vector.shape_cast %49 : vector<2xf32> to vector<2x1xf32>
    %cst_25 = arith.constant 1.280000e+02 : f32
    %51 = vector.broadcast %cst_25 : f32 to vector<2x1xf32>
    %52 = arith.divf %50, %51 : vector<2x1xf32>
    %53 = vector.broadcast %45 : vector<2x1xf32> to vector<2x128xf32>
    %54 = arith.subf %41, %53 : vector<2x128xf32>
    %cst_26 = arith.constant 9.99999974E-6 : f32
    %55 = vector.broadcast %cst_26 : f32 to vector<2x1xf32>
    %56 = arith.addf %52, %55 : vector<2x1xf32>
    %57 = math.rsqrt %56 : vector<2x1xf32>
    %58 = vector.broadcast %57 : vector<2x1xf32> to vector<2x128xf32>
    %59 = arith.mulf %54, %58 : vector<2x128xf32>
    %60 = arith.truncf %59 : vector<2x128xf32> to vector<2x128xbf16>
    %c0_27 = arith.constant 0 : index
    %c256 = arith.constant 256 : index
    %61 = vector.load %arg2[%c0_27, %c256] : memref<128x512xbf16, #tpu.memory_space<vmem>>, vector<128x256xbf16>
    %cst_28 = arith.constant dense<0.000000e+00> : vector<2x256xf32>
    %62 = tpu.matmul %60, %61, %cst_28 {dimension_numbers = #tpu.dot_dimension_numbers<[1], [0], [0], [1], [0, 0, 1, 1], [], []>} : vector<2x128xbf16>, vector<128x256xbf16>, vector<2x256xf32> -> vector<2x256xf32>
    %c2 = arith.constant 2 : index
    %c0_29 = arith.constant 0 : index
    %63 = vector.load %arg4[%c2, %c0_29] : memref<4x256xf32, #tpu.memory_space<vmem>>, vector<1x256xf32>
    %64 = vector.broadcast %63 : vector<1x256xf32> to vector<2x256xf32>
    %65 = arith.addf %62, %64 : vector<2x256xf32>
    %cst_30 = arith.constant 0.000000e+00 : f32
    %66 = vector.broadcast %cst_30 : f32 to vector<2x256xf32>
    %67 = arith.maximumf %65, %66 : vector<2x256xf32>
    %68 = arith.truncf %67 : vector<2x256xf32> to vector<2x256xbf16>
    %c0_31 = arith.constant 0 : index
    %c0_32 = arith.constant 0 : index
    %69 = vector.load %arg3[%c0_31, %c0_32] : memref<256x128xbf16, #tpu.memory_space<vmem>>, vector<256x128xbf16>
    %cst_33 = arith.constant dense<0.000000e+00> : vector<2x128xf32>
    %70 = tpu.matmul %68, %69, %cst_33 {dimension_numbers = #tpu.dot_dimension_numbers<[1], [0], [0], [1], [0, 0, 1, 1], [], []>} : vector<2x256xbf16>, vector<256x128xbf16>, vector<2x128xf32> -> vector<2x128xf32>
    %c3 = arith.constant 3 : index
    %c0_34 = arith.constant 0 : index
    %71 = vector.load %arg4[%c3, %c0_34] : memref<4x256xf32, #tpu.memory_space<vmem>>, vector<1x128xf32>
    %72 = vector.broadcast %71 : vector<1x128xf32> to vector<2x128xf32>
    %73 = arith.addf %70, %72 : vector<2x128xf32>
    %cst_35 = arith.constant 0.000000e+00 : f32
    %74 = vector.broadcast %cst_35 : f32 to vector<6x128xf32>
    %75 = tpu.concatenate %73, %74 in 0 : vector<2x128xf32>, vector<6x128xf32> -> vector<8x128xf32>
    %c0_36 = arith.constant 0 : index
    %c0_37 = arith.constant 0 : index
    %76 = vector.load %arg6[%c0_36, %c0_37] : memref<8x128xf32, #tpu.memory_space<vmem>>, vector<8x128xf32>
    tpu.vector_store %arg6[%c0_36, %c0_37], %75 {strides = array<i32>} : memref<8x128xf32, #tpu.memory_space<vmem>>, vector<8x128xf32>,
    return
  }
}

</mosaic_0001>

<llo_original>
// kernel: tpu_custom_call.1
$region0: #{tpu_custom_call.1}
  #allocation0 [shape = 'u32[]', space=smem, size = 0x4, offset = 0x4, fixed_abs, tag = 'smem constant byte address 0x4 - core index']
  #allocation1 [shape = 'u32[144,128]{1,0:T(1,128)}', space=vmem, size = 0x12000, scoped, tag = 'internal scratch']
  %s0 = inlined_call_operand.hbm [shape: f32[8,768], index: 0, kind: input, shape index: {}]
  %s1 = inlined_call_operand.hbm [shape: bf16[768,128], index: 1, kind: input, shape index: {}]
  %s2 = inlined_call_operand.hbm [shape: bf16[128,512], index: 2, kind: input, shape index: {}]
  %s3 = inlined_call_operand.hbm [shape: bf16[256,128], index: 3, kind: input, shape index: {}]
  %s4 = inlined_call_operand.vmem [shape: f32[4,256], index: 4, kind: input, shape index: {}]
  %s5 = inlined_call_operand.hbm [shape: f32[8,128], index: 5, kind: output, shape index: {0}]
  %s6 = inlined_call_operand.hbm [shape: f32[8,128], index: 6, kind: output, shape index: {1}]
  %7 = xla_tuple %s5, %s6
  %s8 = sld [smem:[#allocation0]]
  $region54: #{tpu_custom_call.1} parent=0
    _
  %s10 = ssub.s32 1, %s8
  %s11 = scalar_select 0, %s10, %s8
  $region1: #{tpu_custom_call.1} parent=0
    #allocation2 [shape = 'u8[24576]{0}', space=vmem, size = 0x6000, scoped, tag = 'input window, operand 0, single buffered']
    #allocation3 [shape = 's32[1]{0}', space=sflag, size = 0x4, scoped, tag = 'scoped memory for tpu_custom_call.1']
    #allocation4 [shape = 's32[1]{0}', space=sflag, size = 0x4, scoped, tag = 'scoped memory for tpu_custom_call.1']
    #allocation5 [shape = 'u8[196608]{0}', space=vmem, size = 0x30000, scoped, tag = 'input window, operand 1, single buffered']
    #allocation6 [shape = 's32[1]{0}', space=sflag, size = 0x4, scoped, tag = 'scoped memory for tpu_custom_call.1']
    #allocation7 [shape = 'u8[131072]{0}', space=vmem, size = 0x20000, scoped, tag = 'input window, operand 2, single buffered']
    #allocation8 [shape = 'u8[65536]{0}', space=vmem, size = 0x10000, scoped, tag = 'input window, operand 3, single buffered']
    #allocation9 [shape = 's32[1]{0}', space=sflag, size = 0x4, scoped, tag = 'scoped memory for tpu_custom_call.1']
    #allocation10 [shape = 'u8[4096]{0}', space=vmem, size = 0x1000, scoped, tag = 'output window, operand 0, single buffered']
    #allocation11 [shape = 'u8[4096]{0}', space=vmem, size = 0x1000, scoped, tag = 'output window, operand 1, single buffered']
    #allocation12 [shape = 's32[1]{0}', space=sflag, size = 0x4, scoped, tag = 'scoped memory for tpu_custom_call.1']
    %12 = vsyncpa [#allocation3], 0
    %13 = vsyncpa [#allocation6], 0
    %14 = vsyncpa [#allocation9], 0
    %15 = vsyncpa [#allocation4], 0
    %16 = vsyncpa [#allocation12], 0
    // Predicated region
    $region2: #{tpu_custom_call.1} parent=1 // pred_check
      _
    $region3: #{tpu_custom_call.1} parent=1 // pred_check_branch
      %18 = sbr.rel (0) target = $region5
    $region4: #{tpu_custom_call.1} parent=1 // pred_region
      %s20 = ssub.s32 768, 768
      %21 = vsyncadd [#allocation3], %s20
      %s23 = sshll.u32 [#allocation2], 4
      %s24 = int_to_ptr.vmem [resolvable:$true] %s23
      %26 = dma.hbm_to_vmem [thread:$0]  %s0, 768, %s24, [#allocation3]
    $region5: #{tpu_custom_call.1} parent=1 // pred_fallthru
      _
    // Predicated region
    $region6: #{tpu_custom_call.1} parent=1 // pred_check
      _
    $region7: #{tpu_custom_call.1} parent=1 // pred_check_branch
      %28 = sbr.rel (0) target = $region9
    $region8: #{tpu_custom_call.1} parent=1 // pred_region
      %s30 = ssub.s32 6144, 6144
      %31 = vsyncadd [#allocation6], %s30
      %s32 = sshll.u32 [#allocation5], 4
      %s33 = int_to_ptr.vmem [resolvable:$true] %s32
      %38 = dma.hbm_to_vmem [thread:$0]  %s1, 6144, %s33, [#allocation6], 64, 64, 4
    $region9: #{tpu_custom_call.1} parent=1 // pred_fallthru
      _
    // Predicated region
    $region10: #{tpu_custom_call.1} parent=1 // pred_check
      _
    $region11: #{tpu_custom_call.1} parent=1 // pred_check_branch
      %40 = sbr.rel (0) target = $region13
    $region12: #{tpu_custom_call.1} parent=1 // pred_region
      %s42 = ssub.s32 4096, 4096
      %43 = vsyncadd [#allocation6], %s42
      %s44 = sshll.u32 [#allocation7], 4
      %s45 = int_to_ptr.vmem [resolvable:$true] %s44
      %50 = dma.hbm_to_vmem [thread:$0]  %s2, 4096, %s45, [#allocation6], 256, 256, 16
    $region13: #{tpu_custom_call.1} parent=1 // pred_fallthru
      _
    // Predicated region
    $region14: #{tpu_custom_call.1} parent=1 // pred_check
      _
    $region15: #{tpu_custom_call.1} parent=1 // pred_check_branch
      %52 = sbr.rel (0) target = $region17
    $region16: #{tpu_custom_call.1} parent=1 // pred_region
      %s54 = ssub.s32 2048, 2048
      %55 = vsyncadd [#allocation9], %s54
      %s56 = sshll.u32 [#allocation8], 4
      %s57 = int_to_ptr.vmem [resolvable:$true] %s56
      %62 = dma.hbm_to_vmem [thread:$0]  %s3, 2048, %s57, [#allocation9], 64, 64, 4
    $region17: #{tpu_custom_call.1} parent=1 // pred_fallthru
      _
    // Predicated region
    $region18: #{tpu_custom_call.1} parent=1 // pred_check
      _
    $region19: #{tpu_custom_call.1} parent=1 // pred_check_branch
      %64 = sbr.rel (0) target = $region21
    $region20: #{tpu_custom_call.1} parent=1 // pred_region
      _
    $region21: #{tpu_custom_call.1} parent=1 // pred_fallthru
      _
    // Predicated region
    $region22: #{tpu_custom_call.1} parent=1 // pred_check
      _
    $region23: #{tpu_custom_call.1} parent=1 // pred_check_branch
      %66 = sbr.rel (0) target = $region25
    $region24: #{tpu_custom_call.1} parent=1 // pred_region
      %67 = dma.done [#allocation3], 768
    $region25: #{tpu_custom_call.1} parent=1 // pred_fallthru
      _
    // Predicated region
    $region26: #{tpu_custom_call.1} parent=1 // pred_check
      _
    $region27: #{tpu_custom_call.1} parent=1 // pred_check_branch
      %69 = sbr.rel (0) target = $region29
    $region28: #{tpu_custom_call.1} parent=1 // pred_region
      %70 = dma.done [#allocation6], 6144
    $region29: #{tpu_custom_call.1} parent=1 // pred_fallthru
      _
    // Predicated region
    $region30: #{tpu_custom_call.1} parent=1 // pred_check
      _
    $region31: #{tpu_custom_call.1} parent=1 // pred_check_branch
      %72 = sbr.rel (0) target = $region33
    $region32: #{tpu_custom_call.1} parent=1 // pred_region
      %73 = dma.done [#allocation6], 4096
    $region33: #{tpu_custom_call.1} parent=1 // pred_fallthru
      _
    // Predicated region
    $region34: #{tpu_custom_call.1} parent=1 // pred_check
      _
    $region35: #{tpu_custom_call.1} parent=1 // pred_check_branch
      %75 = sbr.rel (0) target = $region37
    $region36: #{tpu_custom_call.1} parent=1 // pred_region
      %76 = dma.done [#allocation9], 2048
    $region37: #{tpu_custom_call.1} parent=1 // pred_fallthru
      _
    %v78 = vld [vmem:[#allocation2] sm:$0xff]
    %v79 = vld [vmem:[#allocation2 + $0x8] sm:$0xff]
    %v80 = vld [vmem:[#allocation2 + $0x10] sm:$0xff]
    %v81 = vld [vmem:[#allocation2 + $0x18] sm:$0xff]
    %v82 = vld [vmem:[#allocation2 + $0x20] sm:$0xff]
    %v83 = vld [vmem:[#allocation2 + $0x28] sm:$0xff]
    %v84 = vpack.c.bf16 %v78, %v78
    %v85 = vpack.c.bf16 %v79, %v79
    %v86 = vpack.c.bf16 %v80, %v80
    %v87 = vpack.c.bf16 %v81, %v81
    %v88 = vpack.c.bf16 %v82, %v82
    %v89 = vpack.c.bf16 %v83, %v83
    %v90 = vld [vmem:[#allocation5] sm:$0xf]
    %v91 = vld [vmem:[#allocation5 + $0x4] sm:$0xf]
    %v92 = vld [vmem:[#allocation5 + $0x8] sm:$0xf]
    %v93 = vld [vmem:[#allocation5 + $0xc] sm:$0xf]
    %v94 = vld [vmem:[#allocation5 + $0x10] sm:$0xf]
    %v95 = vld [vmem:[#allocation5 + $0x14] sm:$0xf]
    %v96 = vld [vmem:[#allocation5 + $0x18] sm:$0xf]
    %v97 = vld [vmem:[#allocation5 + $0x1c] sm:$0xf]
    %v98 = vld [vmem:[#allocation5 + $0x20] sm:$0xf]
    %v99 = vld [vmem:[#allocation5 + $0x24] sm:$0xf]
    %v100 = vld [vmem:[#allocation5 + $0x28] sm:$0xf]
    %v101 = vld [vmem:[#allocation5 + $0x2c] sm:$0xf]
    %v102 = vld [vmem:[#allocation5 + $0x30] sm:$0xf]
    %v103 = vld [vmem:[#allocation5 + $0x34] sm:$0xf]
    %v104 = vld [vmem:[#allocation5 + $0x38] sm:$0xf]
    %v105 = vld [vmem:[#allocation5 + $0x3c] sm:$0xf]
    %v106 = vld [vmem:[#allocation5 + $0x40] sm:$0xf]
    %v107 = vld [vmem:[#allocation5 + $0x44] sm:$0xf]
    %v108 = vld [vmem:[#allocation5 + $0x48] sm:$0xf]
    %v109 = vld [vmem:[#allocation5 + $0x4c] sm:$0xf]
    %v110 = vld [vmem:[#allocation5 + $0x50] sm:$0xf]
    %v111 = vld [vmem:[#allocation5 + $0x54] sm:$0xf]
    %v112 = vld [vmem:[#allocation5 + $0x58] sm:$0xf]
    %v113 = vld [vmem:[#allocation5 + $0x5c] sm:$0xf]
    %v114 = vld [vmem:[#allocation5 + $0x60] sm:$0xf]
    %v115 = vld [vmem:[#allocation5 + $0x64] sm:$0xf]
    %v116 = vld [vmem:[#allocation5 + $0x68] sm:$0xf]
    %v117 = vld [vmem:[#allocation5 + $0x6c] sm:$0xf]
    %v118 = vld [vmem:[#allocation5 + $0x70] sm:$0xf]
    %v119 = vld [vmem:[#allocation5 + $0x74] sm:$0xf]
    %v120 = vld [vmem:[#allocation5 + $0x78] sm:$0xf]
    %v121 = vld [vmem:[#allocation5 + $0x7c] sm:$0xf]
    %v122 = vld [vmem:[#allocation5 + $0x80] sm:$0xf]
    %v123 = vld [vmem:[#allocation5 + $0x84] sm:$0xf]
    %v124 = vld [vmem:[#allocation5 + $0x88] sm:$0xf]
    %v125 = vld [vmem:[#allocation5 + $0x8c] sm:$0xf]
    %v126 = vld [vmem:[#allocation5 + $0x90] sm:$0xf]
    %v127 = vld [vmem:[#allocation5 + $0x94] sm:$0xf]
    %v128 = vld [vmem:[#allocation5 + $0x98] sm:$0xf]
    %v129 = vld [vmem:[#allocation5 + $0x9c] sm:$0xf]
    %v130 = vld [vmem:[#allocation5 + $0xa0] sm:$0xf]
    %v131 = vld [vmem:[#allocation5 + $0xa4] sm:$0xf]
    %v132 = vld [vmem:[#allocation5 + $0xa8] sm:$0xf]
    %v133 = vld [vmem:[#allocation5 + $0xac] sm:$0xf]
    %v134 = vld [vmem:[#allocation5 + $0xb0] sm:$0xf]
    %v135 = vld [vmem:[#allocation5 + $0xb4] sm:$0xf]
    %v136 = vld [vmem:[#allocation5 + $0xb8] sm:$0xf]
    %v137 = vld [vmem:[#allocation5 + $0xbc] sm:$0xf]
    %v138 = vld [vmem:[#allocation5 + $0xc0] sm:$0xf]
    %v139 = vld [vmem:[#allocation5 + $0xc4] sm:$0xf]
    %v140 = vld [vmem:[#allocation5 + $0xc8] sm:$0xf]
    %v141 = vld [vmem:[#allocation5 + $0xcc] sm:$0xf]
    %v142 = vld [vmem:[#allocation5 + $0xd0] sm:$0xf]
    %v143 = vld [vmem:[#allocation5 + $0xd4] sm:$0xf]
    %v144 = vld [vmem:[#allocation5 + $0xd8] sm:$0xf]
    %v145 = vld [vmem:[#allocation5 + $0xdc] sm:$0xf]
    %v146 = vld [vmem:[#allocation5 + $0xe0] sm:$0xf]
    %v147 = vld [vmem:[#allocation5 + $0xe4] sm:$0xf]
    %v148 = vld [vmem:[#allocation5 + $0xe8] sm:$0xf]
    %v149 = vld [vmem:[#allocation5 + $0xec] sm:$0xf]
    %v150 = vld [vmem:[#allocation5 + $0xf0] sm:$0xf]
    %v151 = vld [vmem:[#allocation5 + $0xf4] sm:$0xf]
    %v152 = vld [vmem:[#allocation5 + $0xf8] sm:$0xf]
    %v153 = vld [vmem:[#allocation5 + $0xfc] sm:$0xf]
    %v154 = vld [vmem:[#allocation5 + $0x100] sm:$0xf]
    %v155 = vld [vmem:[#allocation5 + $0x104] sm:$0xf]
    %v156 = vld [vmem:[#allocation5 + $0x108] sm:$0xf]
    %v157 = vld [vmem:[#allocation5 + $0x10c] sm:$0xf]
    %v158 = vld [vmem:[#allocation5 + $0x110] sm:$0xf]
    %v159 = vld [vmem:[#allocation5 + $0x114] sm:$0xf]
    %v160 = vld [vmem:[#allocation5 + $0x118] sm:$0xf]
    %v161 = vld [vmem:[#allocation5 + $0x11c] sm:$0xf]
    %v162 = vld [vmem:[#allocation5 + $0x120] sm:$0xf]
    %v163 = vld [vmem:[#allocation5 + $0x124] sm:$0xf]
    %v164 = vld [vmem:[#allocation5 + $0x128] sm:$0xf]
    %v165 = vld [vmem:[#allocation5 + $0x12c] sm:$0xf]
    %v166 = vld [vmem:[#allocation5 + $0x130] sm:$0xf]
    %v167 = vld [vmem:[#allocation5 + $0x134] sm:$0xf]
    %v168 = vld [vmem:[#allocation5 + $0x138] sm:$0xf]
    %v169 = vld [vmem:[#allocation5 + $0x13c] sm:$0xf]
    %v170 = vld [vmem:[#allocation5 + $0x140] sm:$0xf]
    %v171 = vld [vmem:[#allocation5 + $0x144] sm:$0xf]
    %v172 = vld [vmem:[#allocation5 + $0x148] sm:$0xf]
    %v173 = vld [vmem:[#allocation5 + $0x14c] sm:$0xf]
    %v174 = vld [vmem:[#allocation5 + $0x150] sm:$0xf]
    %v175 = vld [vmem:[#allocation5 + $0x154] sm:$0xf]
    %v176 = vld [vmem:[#allocation5 + $0x158] sm:$0xf]
    %v177 = vld [vmem:[#allocation5 + $0x15c] sm:$0xf]
    %v178 = vld [vmem:[#allocation5 + $0x160] sm:$0xf]
    %v179 = vld [vmem:[#allocation5 + $0x164] sm:$0xf]
    %v180 = vld [vmem:[#allocation5 + $0x168] sm:$0xf]
    %v181 = vld [vmem:[#allocation5 + $0x16c] sm:$0xf]
    %v182 = vld [vmem:[#allocation5 + $0x170] sm:$0xf]
    %v183 = vld [vmem:[#allocation5 + $0x174] sm:$0xf]
    %v184 = vld [vmem:[#allocation5 + $0x178] sm:$0xf]
    %v185 = vld [vmem:[#allocation5 + $0x17c] sm:$0xf]
    %v186 = vld [vmem:[%s4] sm:$0x1]
    %v187 = vlaneseq
    %v188 = vshrl.u32 %v187, 7
    %v189 = vsub.s32 0, %v188
    %v190 = vrot.slane %v186, %v189
    %v287 = vunpack.c.l.b16 %v90
    %v288 = vunpack.c.l.b16 %v91
    %v289 = vunpack.c.l.b16 %v92
    %v290 = vunpack.c.l.b16 %v93
    %v291 = vunpack.c.l.b16 %v94
    %v292 = vunpack.c.l.b16 %v95
    %v293 = vunpack.c.l.b16 %v96
    %v294 = vunpack.c.l.b16 %v97
    %v295 = vunpack.c.l.b16 %v98
    %v296 = vunpack.c.l.b16 %v99
    %v297 = vunpack.c.l.b16 %v100
    %v298 = vunpack.c.l.b16 %v101
    %v299 = vunpack.c.l.b16 %v102
    %v300 = vunpack.c.l.b16 %v103
    %v301 = vunpack.c.l.b16 %v104
    %v302 = vunpack.c.l.b16 %v105
    %v303 = vunpack.c.l.b16 %v106
    %v304 = vunpack.c.l.b16 %v107
    %v305 = vunpack.c.l.b16 %v108
    %v306 = vunpack.c.l.b16 %v109
    %v307 = vunpack.c.l.b16 %v110
    %v308 = vunpack.c.l.b16 %v111
    %v309 = vunpack.c.l.b16 %v112
    %v310 = vunpack.c.l.b16 %v113
    %v311 = vunpack.c.l.b16 %v114
    %v312 = vunpack.c.l.b16 %v115
    %v313 = vunpack.c.l.b16 %v116
    %v314 = vunpack.c.l.b16 %v117
    %v315 = vunpack.c.l.b16 %v118
    %v316 = vunpack.c.l.b16 %v119
    %v317 = vunpack.c.l.b16 %v120
    %v318 = vunpack.c.l.b16 %v121
    %v319 = vunpack.c.l.b16 %v122
    %v320 = vunpack.c.l.b16 %v123
    %v321 = vunpack.c.l.b16 %v124
    %v322 = vunpack.c.l.b16 %v125
    %v323 = vunpack.c.l.b16 %v126
    %v324 = vunpack.c.l.b16 %v127
    %v325 = vunpack.c.l.b16 %v128
    %v326 = vunpack.c.l.b16 %v129
    %v327 = vunpack.c.l.b16 %v130
    %v328 = vunpack.c.l.b16 %v131
    %v329 = vunpack.c.l.b16 %v132
    %v330 = vunpack.c.l.b16 %v133
    %v331 = vunpack.c.l.b16 %v134
    %v332 = vunpack.c.l.b16 %v135
    %v333 = vunpack.c.l.b16 %v136
    %v334 = vunpack.c.l.b16 %v137
    %v335 = vunpack.c.l.b16 %v138
    %v336 = vunpack.c.l.b16 %v139
    %v337 = vunpack.c.l.b16 %v140
    %v338 = vunpack.c.l.b16 %v141
    %v339 = vunpack.c.l.b16 %v142
    %v340 = vunpack.c.l.b16 %v143
    %v341 = vunpack.c.l.b16 %v144
    %v342 = vunpack.c.l.b16 %v145
    %v343 = vunpack.c.l.b16 %v146
    %v344 = vunpack.c.l.b16 %v147
    %v345 = vunpack.c.l.b16 %v148
    %v346 = vunpack.c.l.b16 %v149
    %v347 = vunpack.c.l.b16 %v150
    %v348 = vunpack.c.l.b16 %v151
    %v349 = vunpack.c.l.b16 %v152
    %v350 = vunpack.c.l.b16 %v153
    %v351 = vunpack.c.l.b16 %v154
    %v352 = vunpack.c.l.b16 %v155
    %v353 = vunpack.c.l.b16 %v156
    %v354 = vunpack.c.l.b16 %v157
    %v355 = vunpack.c.l.b16 %v158
    %v356 = vunpack.c.l.b16 %v159
    %v357 = vunpack.c.l.b16 %v160
    %v358 = vunpack.c.l.b16 %v161
    %v359 = vunpack.c.l.b16 %v162
    %v360 = vunpack.c.l.b16 %v163
    %v361 = vunpack.c.l.b16 %v164
    %v362 = vunpack.c.l.b16 %v165
    %v363 = vunpack.c.l.b16 %v166
    %v364 = vunpack.c.l.b16 %v167
    %v365 = vunpack.c.l.b16 %v168
    %v366 = vunpack.c.l.b16 %v169
    %v367 = vunpack.c.l.b16 %v170
    %v368 = vunpack.c.l.b16 %v171
    %v369 = vunpack.c.l.b16 %v172
    %v370 = vunpack.c.l.b16 %v173
    %v371 = vunpack.c.l.b16 %v174
    %v372 = vunpack.c.l.b16 %v175
    %v373 = vunpack.c.l.b16 %v176
    %v374 = vunpack.c.l.b16 %v177
    %v375 = vunpack.c.l.b16 %v178
    %v376 = vunpack.c.l.b16 %v179
    %v377 = vunpack.c.l.b16 %v180
    %v378 = vunpack.c.l.b16 %v181
    %v379 = vunpack.c.l.b16 %v182
    %v380 = vunpack.c.l.b16 %v183
    %v381 = vunpack.c.l.b16 %v184
    %v382 = vunpack.c.l.b16 %v185
    %v383 = vpack.c.b16 %v288, %v287
    %v384 = vpack.c.b16 %v290, %v289
    %v385 = vpack.c.b16 %v292, %v291
    %v386 = vpack.c.b16 %v294, %v293
    %v387 = vpack.c.b16 %v296, %v295
    %v388 = vpack.c.b16 %v298, %v297
    %v389 = vpack.c.b16 %v300, %v299
    %v390 = vpack.c.b16 %v302, %v301
    %v391 = vpack.c.b16 %v304, %v303
    %v392 = vpack.c.b16 %v306, %v305
    %v393 = vpack.c.b16 %v308, %v307
    %v394 = vpack.c.b16 %v310, %v309
    %v395 = vpack.c.b16 %v312, %v311
    %v396 = vpack.c.b16 %v314, %v313
    %v397 = vpack.c.b16 %v316, %v315
    %v398 = vpack.c.b16 %v318, %v317
    %v399 = vpack.c.b16 %v320, %v319
    %v400 = vpack.c.b16 %v322, %v321
    %v401 = vpack.c.b16 %v324, %v323
    %v402 = vpack.c.b16 %v326, %v325
    %v403 = vpack.c.b16 %v328, %v327
    %v404 = vpack.c.b16 %v330, %v329
    %v405 = vpack.c.b16 %v332, %v331
    %v406 = vpack.c.b16 %v334, %v333
    %v407 = vpack.c.b16 %v336, %v335
    %v408 = vpack.c.b16 %v338, %v337
    %v409 = vpack.c.b16 %v340, %v339
    %v410 = vpack.c.b16 %v342, %v341
    %v411 = vpack.c.b16 %v344, %v343
    %v412 = vpack.c.b16 %v346, %v345
    %v413 = vpack.c.b16 %v348, %v347
    %v414 = vpack.c.b16 %v350, %v349
    %v415 = vpack.c.b16 %v352, %v351
    %v416 = vpack.c.b16 %v354, %v353
    %v417 = vpack.c.b16 %v356, %v355
    %v418 = vpack.c.b16 %v358, %v357
    %v419 = vpack.c.b16 %v360, %v359
    %v420 = vpack.c.b16 %v362, %v361
    %v421 = vpack.c.b16 %v364, %v363
    %v422 = vpack.c.b16 %v366, %v365
    %v423 = vpack.c.b16 %v368, %v367
    %v424 = vpack.c.b16 %v370, %v369
    %v425 = vpack.c.b16 %v372, %v371
    %v426 = vpack.c.b16 %v374, %v373
    %v427 = vpack.c.b16 %v376, %v375
    %v428 = vpack.c.b16 %v378, %v377
    %v429 = vpack.c.b16 %v380, %v379
    %v430 = vpack.c.b16 %v382, %v381
    %479 = vmatprep.subr.bf16.mxu0 0
    %480 = vmatpush1.bf16.msra.mxu0 %v383
    %481 = vmatprep.subr.bf16.mxu0 0
    %482 = vmatpush1.bf16.msra.mxu0 %v384
    %483 = vmatprep.subr.bf16.mxu0 0
    %484 = vmatpush1.bf16.msra.mxu0 %v385
    %485 = vmatprep.subr.bf16.mxu0 0
    %486 = vmatpush1.bf16.msra.mxu0 %v386
    %487 = vmatprep.subr.bf16.mxu0 0
    %488 = vmatpush1.bf16.msra.mxu0 %v387
    %489 = vmatprep.subr.bf16.mxu0 0
    %490 = vmatpush1.bf16.msra.mxu0 %v388
    %491 = vmatprep.subr.bf16.mxu0 0
    %492 = vmatpush1.bf16.msra.mxu0 %v389
    %493 = vmatprep.subr.bf16.mxu0 0
    %494 = vmatpush1.bf16.msra.mxu0 %v390
    %495 = vmatprep.subr.bf16.mxu0 0
    %496 = vmatpush1.bf16.msra.mxu0 %v391
    %497 = vmatprep.subr.bf16.mxu0 0
    %498 = vmatpush1.bf16.msra.mxu0 %v392
    %499 = vmatprep.subr.bf16.mxu0 0
    %500 = vmatpush1.bf16.msra.mxu0 %v393
    %501 = vmatprep.subr.bf16.mxu0 0
    %502 = vmatpush1.bf16.msra.mxu0 %v394
    %503 = vmatprep.subr.bf16.mxu0 0
    %504 = vmatpush1.bf16.msra.mxu0 %v395
    %505 = vmatprep.subr.bf16.mxu0 0
    %506 = vmatpush1.bf16.msra.mxu0 %v396
    %507 = vmatprep.subr.bf16.mxu0 0
    %508 = vmatpush1.bf16.msra.mxu0 %v397
    %509 = vmatprep.subr.bf16.mxu0 0
    %510 = vmatpush1.bf16.msra.mxu0 %v398
    %511 = vmatprep.mubr.bf16.mxu0 %v85
    %512 = vmatmul.mubr.bf16.gmra.mrb[0].mxu0 %v84
    %v513 = vpop.f32.mrb[0].mxu0
    %v514 = vadd.f32 %v190, %v513
    %v515 = vpop.f32.mrb[0].mxu0
    %v516 = vpop.f32.mrb[0].mxu0
    %v517 = vpop.f32.mrb[0].mxu0
    %518 = vdwg.mxu0
    %519 = vmatprep.subr.bf16.mxu0 0
    %520 = vmatpush1.bf16.msra.mxu0 %v399
    %521 = vmatprep.subr.bf16.mxu0 0
    %522 = vmatpush1.bf16.msra.mxu0 %v400
    %523 = vmatprep.subr.bf16.mxu0 0
    %524 = vmatpush1.bf16.msra.mxu0 %v401
    %525 = vmatprep.subr.bf16.mxu0 0
    %526 = vmatpush1.bf16.msra.mxu0 %v402
    %527 = vmatprep.subr.bf16.mxu0 0
    %528 = vmatpush1.bf16.msra.mxu0 %v403
    %529 = vmatprep.subr.bf16.mxu0 0
    %530 = vmatpush1.bf16.msra.mxu0 %v404
    %531 = vmatprep.subr.bf16.mxu0 0
    %532 = vmatpush1.bf16.msra.mxu0 %v405
    %533 = vmatprep.subr.bf16.mxu0 0
    %534 = vmatpush1.bf16.msra.mxu0 %v406
    %535 = vmatprep.subr.bf16.mxu0 0
    %536 = vmatpush1.bf16.msra.mxu0 %v407
    %537 = vmatprep.subr.bf16.mxu0 0
    %538 = vmatpush1.bf16.msra.mxu0 %v408
    %539 = vmatprep.subr.bf16.mxu0 0
    %540 = vmatpush1.bf16.msra.mxu0 %v409
    %541 = vmatprep.subr.bf16.mxu0 0
    %542 = vmatpush1.bf16.msra.mxu0 %v410
    %543 = vmatprep.subr.bf16.mxu0 0
    %544 = vmatpush1.bf16.msra.mxu0 %v411
    %545 = vmatprep.subr.bf16.mxu0 0
    %546 = vmatpush1.bf16.msra.mxu0 %v412
    %547 = vmatprep.subr.bf16.mxu0 0
    %548 = vmatpush1.bf16.msra.mxu0 %v413
    %549 = vmatprep.subr.bf16.mxu0 0
    %550 = vmatpush1.bf16.msra.mxu0 %v414
    %551 = vmatprep.mubr.bf16.mxu0 %v87
    %552 = vmatmul.mubr.bf16.gmra.mrb[0].mxu0 %v86
    %v553 = vpop.f32.mrb[0].mxu0
    %v554 = vadd.f32 %v514, %v553
    %v555 = vpop.f32.mrb[0].mxu0
    %v556 = vpop.f32.mrb[0].mxu0
    %v557 = vpop.f32.mrb[0].mxu0
    %558 = vdwg.mxu0
    %559 = vmatprep.subr.bf16.mxu0 0
    %560 = vmatpush1.bf16.msra.mxu0 %v415
    %561 = vmatprep.subr.bf16.mxu0 0
    %562 = vmatpush1.bf16.msra.mxu0 %v416
    %563 = vmatprep.subr.bf16.mxu0 0
    %564 = vmatpush1.bf16.msra.mxu0 %v417
    %565 = vmatprep.subr.bf16.mxu0 0
    %566 = vmatpush1.bf16.msra.mxu0 %v418
    %567 = vmatprep.subr.bf16.mxu0 0
    %568 = vmatpush1.bf16.msra.mxu0 %v419
    %569 = vmatprep.subr.bf16.mxu0 0
    %570 = vmatpush1.bf16.msra.mxu0 %v420
    %571 = vmatprep.subr.bf16.mxu0 0
    %572 = vmatpush1.bf16.msra.mxu0 %v421
    %573 = vmatprep.subr.bf16.mxu0 0
    %574 = vmatpush1.bf16.msra.mxu0 %v422
    %575 = vmatprep.subr.bf16.mxu0 0
    %576 = vmatpush1.bf16.msra.mxu0 %v423
    %577 = vmatprep.subr.bf16.mxu0 0
    %578 = vmatpush1.bf16.msra.mxu0 %v424
    %579 = vmatprep.subr.bf16.mxu0 0
    %580 = vmatpush1.bf16.msra.mxu0 %v425
    %581 = vmatprep.subr.bf16.mxu0 0
    %582 = vmatpush1.bf16.msra.mxu0 %v426
    %583 = vmatprep.subr.bf16.mxu0 0
    %584 = vmatpush1.bf16.msra.mxu0 %v427
    %585 = vmatprep.subr.bf16.mxu0 0
    %586 = vmatpush1.bf16.msra.mxu0 %v428
    %587 = vmatprep.subr.bf16.mxu0 0
    %588 = vmatpush1.bf16.msra.mxu0 %v429
    %589 = vmatprep.subr.bf16.mxu0 0
    %590 = vmatpush1.bf16.msra.mxu0 %v430
    %591 = vmatprep.mubr.bf16.mxu0 %v89
    %592 = vmatmul.mubr.bf16.gmra.mrb[0].mxu0 %v88
    %v593 = vpop.f32.mrb[0].mxu0
    %v594 = vadd.f32 %v554, %v593
    %v595 = vpop.f32.mrb[0].mxu0
    %v596 = vpop.f32.mrb[0].mxu0
    %v597 = vpop.f32.mrb[0].mxu0
    %598 = vdwg.mxu0
    %599 = vst [vmem:[#allocation10] sm:$0xff] %v594
    %v601 = vcombine.high %v594, %v594
    %vm603 = vcmask 1043456
    %v604 = vsel %vm603, %v594, -inf
    %v605 = vrot.slane %v604, 4
    %v606 = vmax.f32 %v604, %v605
    %v607 = vrot.slane %v606, 2
    %v608 = vmax.f32 %v606, %v607
    %v609 = vrot.slane %v608, 1
    %v610 = vmax.f32 %v608, %v609
    %v611 = vsel %vm603, %v601, -inf
    %v612 = vrot.slane %v611, 4
    %v613 = vmax.f32 %v611, %v612
    %v614 = vrot.slane %v613, 2
    %v615 = vmax.f32 %v613, %v614
    %v616 = vrot.slane %v615, 1
    %v617 = vmax.f32 %v615, %v616
    %vm620 = vcmask 1041409
    %v621 = vsel %vm620, %v617, %v610
    %vm623 = vcmask 1041408
    %v624 = vsel %vm623, %v621, 0.0
    %625 = vadd.xlane.f32.xlu0 %v624
    %v626 = vpop.xlane.xlu0 %625
    %v627 = vrcp.pop 128.0
    %v628 = vmul.f32 %v626, %v627
    %v630 = vrot.slane %v628, 1
    %v633 = vsub.f32 %v610, %v628
    %v634 = vsub.f32 %v617, %v630
    %v635 = vmul.f32 %v633, %v633
    %v636 = vmul.f32 %v634, %v634
    %v639 = vrot.slane %v636, 7
    %v640 = vsel %vm620, %v639, %v635
    %v642 = vsel %vm623, %v640, 0.0
    %643 = vadd.xlane.f32.xlu0 %v642
    %v644 = vpop.xlane.xlu0 %643
    %v645 = vmul.f32 %v644, %v627
    %v646 = vadd.f32 %v645, 1e-05
    %v647 = vrsqrt.pop %v646
    %v649 = vrot.slane %v647, 1
    %v652 = vmul.f32 %v633, %v647
    %v653 = vmul.f32 %v634, %v649
    %v654 = vpack.c.bf16 %v652, %v652
    %v655 = vpack.c.bf16 %v653, %v653
    %v656 = vld [vmem:[#allocation7] sm:$0xf]
    %v657 = vld [vmem:[#allocation7 + $0x10] sm:$0xf]
    %v658 = vld [vmem:[#allocation7 + $0x20] sm:$0xf]
    %v659 = vld [vmem:[#allocation7 + $0x30] sm:$0xf]
    %v660 = vld [vmem:[#allocation7 + $0x40] sm:$0xf]
    %v661 = vld [vmem:[#allocation7 + $0x50] sm:$0xf]
    %v662 = vld [vmem:[#allocation7 + $0x60] sm:$0xf]
    %v663 = vld [vmem:[#allocation7 + $0x70] sm:$0xf]
    %v664 = vld [vmem:[#allocation7 + $0x80] sm:$0xf]
    %v665 = vld [vmem:[#allocation7 + $0x90] sm:$0xf]
    %v666 = vld [vmem:[#allocation7 + $0xa0] sm:$0xf]
    %v667 = vld [vmem:[#allocation7 + $0xb0] sm:$0xf]
    %v668 = vld [vmem:[#allocation7 + $0xc0] sm:$0xf]
    %v669 = vld [vmem:[#allocation7 + $0xd0] sm:$0xf]
    %v670 = vld [vmem:[#allocation7 + $0xe0] sm:$0xf]
    %v671 = vld [vmem:[#allocation7 + $0xf0] sm:$0xf]
    %v672 = vld [vmem:[%s4 + $0x1] sm:$0x1]
    %v673 = vlaneseq
    %v674 = vshrl.u32 %v673, 7
    %v675 = vsub.s32 0, %v674
    %v676 = vrot.slane %v672, %v675
    %v679 = vunpack.c.l.b16 %v654
    %v680 = vunpack.c.l.b16 %v655
    %v681 = vrot.slane %v680, 7
    %v682 = vsel %vm620, %v681, %v679
    %v683 = vpack.c.b16 %v682, %v682
    %v701 = vunpack.c.l.b16 %v656
    %v702 = vunpack.c.l.b16 %v657
    %v703 = vunpack.c.l.b16 %v658
    %v704 = vunpack.c.l.b16 %v659
    %v705 = vunpack.c.l.b16 %v660
    %v706 = vunpack.c.l.b16 %v661
    %v707 = vunpack.c.l.b16 %v662
    %v708 = vunpack.c.l.b16 %v663
    %v709 = vunpack.c.l.b16 %v664
    %v710 = vunpack.c.l.b16 %v665
    %v711 = vunpack.c.l.b16 %v666
    %v712 = vunpack.c.l.b16 %v667
    %v713 = vunpack.c.l.b16 %v668
    %v714 = vunpack.c.l.b16 %v669
    %v715 = vunpack.c.l.b16 %v670
    %v716 = vunpack.c.l.b16 %v671
    %v717 = vpack.c.b16 %v702, %v701
    %v718 = vpack.c.b16 %v704, %v703
    %v719 = vpack.c.b16 %v706, %v705
    %v720 = vpack.c.b16 %v708, %v707
    %v721 = vpack.c.b16 %v710, %v709
    %v722 = vpack.c.b16 %v712, %v711
    %v723 = vpack.c.b16 %v714, %v713
    %v724 = vpack.c.b16 %v716, %v715
    %733 = vmatprep.subr.bf16.mxu0 0
    %734 = vmatpush1.bf16.msra.mxu0 %v717
    %735 = vmatprep.subr.bf16.mxu0 0
    %736 = vmatpush1.bf16.msra.mxu0 %v718
    %737 = vmatprep.subr.bf16.mxu0 0
    %738 = vmatpush1.bf16.msra.mxu0 %v719
    %739 = vmatprep.subr.bf16.mxu0 0
    %740 = vmatpush1.bf16.msra.mxu0 %v720
    %741 = vmatprep.subr.bf16.mxu0 0
    %742 = vmatpush1.bf16.msra.mxu0 %v721
    %743 = vmatprep.subr.bf16.mxu0 0
    %744 = vmatpush1.bf16.msra.mxu0 %v722
    %745 = vmatprep.subr.bf16.mxu0 0
    %746 = vmatpush1.bf16.msra.mxu0 %v723
    %747 = vmatprep.subr.bf16.mxu0 0
    %748 = vmatpush1.bf16.msra.mxu0 %v724
    %749 = vmatprep.subr.bf16.mxu0 0
    %750 = vmatpush1.bf16.msra.mxu0 0
    %751 = vmatprep.subr.bf16.mxu0 0
    %752 = vmatpush1.bf16.msra.mxu0 0
    %753 = vmatprep.subr.bf16.mxu0 0
    %754 = vmatpush1.bf16.msra.mxu0 0
    %755 = vmatprep.subr.bf16.mxu0 0
    %756 = vmatpush1.bf16.msra.mxu0 0
    %757 = vmatprep.subr.bf16.mxu0 0
    %758 = vmatpush1.bf16.msra.mxu0 0
    %759 = vmatprep.subr.bf16.mxu0 0
    %760 = vmatpush1.bf16.msra.mxu0 0
    %761 = vmatprep.subr.bf16.mxu0 0
    %762 = vmatpush1.bf16.msra.mxu0 0
    %763 = vmatprep.subr.bf16.mxu0 0
    %764 = vmatpush1.bf16.msra.mxu0 0
    %765 = vmatprep.mubr.bf16.mxu0 0
    %766 = vmatmul.mubr.bf16.gmra.mrb[0].mxu0 %v683
    %v767 = vpop.f32.mrb[0].mxu0
    %v768 = vadd.f32 %v676, %v767
    %v769 = vpop.f32.mrb[0].mxu0
    %v770 = vpop.f32.mrb[0].mxu0
    %v771 = vpop.f32.mrb[0].mxu0
    %772 = vdwg.mxu0
    %v773 = vmax.f32 %v768, 0.0
    %v774 = vpack.c.bf16 %v773, %v773
    %v775 = vld [vmem:[#allocation7 + $0x4] sm:$0xf]
    %v776 = vld [vmem:[#allocation7 + $0x14] sm:$0xf]
    %v777 = vld [vmem:[#allocation7 + $0x24] sm:$0xf]
    %v778 = vld [vmem:[#allocation7 + $0x34] sm:$0xf]
    %v779 = vld [vmem:[#allocation7 + $0x44] sm:$0xf]
    %v780 = vld [vmem:[#allocation7 + $0x54] sm:$0xf]
    %v781 = vld [vmem:[#allocation7 + $0x64] sm:$0xf]
    %v782 = vld [vmem:[#allocation7 + $0x74] sm:$0xf]
    %v783 = vld [vmem:[#allocation7 + $0x84] sm:$0xf]
    %v784 = vld [vmem:[#allocation7 + $0x94] sm:$0xf]
    %v785 = vld [vmem:[#allocation7 + $0xa4] sm:$0xf]
    %v786 = vld [vmem:[#allocation7 + $0xb4] sm:$0xf]
    %v787 = vld [vmem:[#allocation7 + $0xc4] sm:$0xf]
    %v788 = vld [vmem:[#allocation7 + $0xd4] sm:$0xf]
    %v789 = vld [vmem:[#allocation7 + $0xe4] sm:$0xf]
    %v790 = vld [vmem:[#allocation7 + $0xf4] sm:$0xf]
    %v791 = vld [vmem:[%s4 + $0x5] sm:$0x1]
    %v792 = vlaneseq
    %v793 = vshrl.u32 %v792, 7
    %v794 = vsub.s32 0, %v793
    %v795 = vrot.slane %v791, %v794
    %v812 = vunpack.c.l.b16 %v775
    %v813 = vunpack.c.l.b16 %v776
    %v814 = vunpack.c.l.b16 %v777
    %v815 = vunpack.c.l.b16 %v778
    %v816 = vunpack.c.l.b16 %v779
    %v817 = vunpack.c.l.b16 %v780
    %v818 = vunpack.c.l.b16 %v781
    %v819 = vunpack.c.l.b16 %v782
    %v820 = vunpack.c.l.b16 %v783
    %v821 = vunpack.c.l.b16 %v784
    %v822 = vunpack.c.l.b16 %v785
    %v823 = vunpack.c.l.b16 %v786
    %v824 = vunpack.c.l.b16 %v787
    %v825 = vunpack.c.l.b16 %v788
    %v826 = vunpack.c.l.b16 %v789
    %v827 = vunpack.c.l.b16 %v790
    %v828 = vpack.c.b16 %v813, %v812
    %v829 = vpack.c.b16 %v815, %v814
    %v830 = vpack.c.b16 %v817, %v816
    %v831 = vpack.c.b16 %v819, %v818
    %v832 = vpack.c.b16 %v821, %v820
    %v833 = vpack.c.b16 %v823, %v822
    %v834 = vpack.c.b16 %v825, %v824
    %v835 = vpack.c.b16 %v827, %v826
    %844 = vmatprep.subr.bf16.mxu0 0
    %845 = vmatpush1.bf16.msra.mxu0 %v828
    %846 = vmatprep.subr.bf16.mxu0 0
    %847 = vmatpush1.bf16.msra.mxu0 %v829
    %848 = vmatprep.subr.bf16.mxu0 0
    %849 = vmatpush1.bf16.msra.mxu0 %v830
    %850 = vmatprep.subr.bf16.mxu0 0
    %851 = vmatpush1.bf16.msra.mxu0 %v831
    %852 = vmatprep.subr.bf16.mxu0 0
    %853 = vmatpush1.bf16.msra.mxu0 %v832
    %854 = vmatprep.subr.bf16.mxu0 0
    %855 = vmatpush1.bf16.msra.mxu0 %v833
    %856 = vmatprep.subr.bf16.mxu0 0
    %857 = vmatpush1.bf16.msra.mxu0 %v834
    %858 = vmatprep.subr.bf16.mxu0 0
    %859 = vmatpush1.bf16.msra.mxu0 %v835
    %860 = vmatprep.subr.bf16.mxu0 0
    %861 = vmatpush1.bf16.msra.mxu0 0
    %862 = vmatprep.subr.bf16.mxu0 0
    %863 = vmatpush1.bf16.msra.mxu0 0
    %864 = vmatprep.subr.bf16.mxu0 0
    %865 = vmatpush1.bf16.msra.mxu0 0
    %866 = vmatprep.subr.bf16.mxu0 0
    %867 = vmatpush1.bf16.msra.mxu0 0
    %868 = vmatprep.subr.bf16.mxu0 0
    %869 = vmatpush1.bf16.msra.mxu0 0
    %870 = vmatprep.subr.bf16.mxu0 0
    %871 = vmatpush1.bf16.msra.mxu0 0
    %872 = vmatprep.subr.bf16.mxu0 0
    %873 = vmatpush1.bf16.msra.mxu0 0
    %874 = vmatprep.subr.bf16.mxu0 0
    %875 = vmatpush1.bf16.msra.mxu0 0
    %876 = vmatprep.mubr.bf16.mxu0 0
    %877 = vmatmul.mubr.bf16.gmra.mrb[0].mxu0 %v774
    %v878 = vpop.f32.mrb[0].mxu0
    %v879 = vadd.f32 %v795, %v878
    %v880 = vpop.f32.mrb[0].mxu0
    %v881 = vpop.f32.mrb[0].mxu0
    %v882 = vpop.f32.mrb[0].mxu0
    %883 = vdwg.mxu0
    %v884 = vsel %vm623, %v879, 0.0
    %885 = vadd.xlane.f32.xlu0 %v884
    %v886 = vpop.xlane.xlu0 %885
    %v887 = vmul.f32 %v886, %v627
    %v888 = vsub.f32 %v879, %v887
    %v889 = vmul.f32 %v888, %v888
    %v890 = vsel %vm623, %v889, 0.0
    %891 = vadd.xlane.f32.xlu0 %v890
    %v892 = vpop.xlane.xlu0 %891
    %v893 = vmul.f32 %v892, %v627
    %v894 = vadd.f32 %v893, 1e-05
    %v895 = vrsqrt.pop %v894
    %v896 = vmul.f32 %v888, %v895
    %v897 = vpack.c.bf16 %v896, %v896
    %v898 = vld [vmem:[#allocation7 + $0x8] sm:$0xff]
    %v899 = vld [vmem:[#allocation7 + $0x18] sm:$0xff]
    %v900 = vld [vmem:[#allocation7 + $0x28] sm:$0xff]
    %v901 = vld [vmem:[#allocation7 + $0x38] sm:$0xff]
    %v902 = vld [vmem:[#allocation7 + $0x48] sm:$0xff]
    %v903 = vld [vmem:[#allocation7 + $0x58] sm:$0xff]
    %v904 = vld [vmem:[#allocation7 + $0x68] sm:$0xff]
    %v905 = vld [vmem:[#allocation7 + $0x78] sm:$0xff]
    %v906 = vld [vmem:[#allocation7 + $0x88] sm:$0xff]
    %v907 = vld [vmem:[#allocation7 + $0x98] sm:$0xff]
    %v908 = vld [vmem:[#allocation7 + $0xa8] sm:$0xff]
    %v909 = vld [vmem:[#allocation7 + $0xb8] sm:$0xff]
    %v910 = vld [vmem:[#allocation7 + $0xc8] sm:$0xff]
    %v911 = vld [vmem:[#allocation7 + $0xd8] sm:$0xff]
    %v912 = vld [vmem:[#allocation7 + $0xe8] sm:$0xff]
    %v913 = vld [vmem:[#allocation7 + $0xf8] sm:$0xff]
    %s914 = scalar_lea.vmem %s4, 2
    %v915 = vld [vmem:[%s914] ss:$4 sm:$0x3]
    %v917 = vlaneseq
    %v918 = vshrl.u32 %v917, 7
    %v919 = vsub.s32 0, %v918
    %v920 = vrot.slane %v915, %v919
    %v921 = vlaneseq
    %v922 = vshrl.u32 %v921, 7
    %v923 = vsub.s32 1, %v922
    %v924 = vrot.slane %v915, %v923
    %v943 = vunpack.c.l.b16 %v898
    %v944 = vunpack.c.h.b16 %v898
    %v945 = vunpack.c.l.b16 %v899
    %v946 = vunpack.c.h.b16 %v899
    %v947 = vunpack.c.l.b16 %v900
    %v948 = vunpack.c.h.b16 %v900
    %v949 = vunpack.c.l.b16 %v901
    %v950 = vunpack.c.h.b16 %v901
    %v951 = vunpack.c.l.b16 %v902
    %v952 = vunpack.c.h.b16 %v902
    %v953 = vunpack.c.l.b16 %v903
    %v954 = vunpack.c.h.b16 %v903
    %v955 = vunpack.c.l.b16 %v904
    %v956 = vunpack.c.h.b16 %v904
    %v957 = vunpack.c.l.b16 %v905
    %v958 = vunpack.c.h.b16 %v905
    %v959 = vunpack.c.l.b16 %v906
    %v960 = vunpack.c.h.b16 %v906
    %v961 = vunpack.c.l.b16 %v907
    %v962 = vunpack.c.h.b16 %v907
    %v963 = vunpack.c.l.b16 %v908
    %v964 = vunpack.c.h.b16 %v908
    %v965 = vunpack.c.l.b16 %v909
    %v966 = vunpack.c.h.b16 %v909
    %v967 = vunpack.c.l.b16 %v910
    %v968 = vunpack.c.h.b16 %v910
    %v969 = vunpack.c.l.b16 %v911
    %v970 = vunpack.c.h.b16 %v911
    %v971 = vunpack.c.l.b16 %v912
    %v972 = vunpack.c.h.b16 %v912
    %v973 = vunpack.c.l.b16 %v913
    %v974 = vunpack.c.h.b16 %v913
    %v975 = vpack.c.b16 %v945, %v943
    %v976 = vpack.c.b16 %v946, %v944
    %v977 = vpack.c.b16 %v949, %v947
    %v978 = vpack.c.b16 %v950, %v948
    %v979 = vpack.c.b16 %v953, %v951
    %v980 = vpack.c.b16 %v954, %v952
    %v981 = vpack.c.b16 %v957, %v955
    %v982 = vpack.c.b16 %v958, %v956
    %v983 = vpack.c.b16 %v961, %v959
    %v984 = vpack.c.b16 %v962, %v960
    %v985 = vpack.c.b16 %v965, %v963
    %v986 = vpack.c.b16 %v966, %v964
    %v987 = vpack.c.b16 %v969, %v967
    %v988 = vpack.c.b16 %v970, %v968
    %v989 = vpack.c.b16 %v973, %v971
    %v990 = vpack.c.b16 %v974, %v972
    %1007 = vmatprep.subr.bf16.mxu0 %v976
    %1008 = vmatpush1.bf16.msra.mxu0 %v975
    %1009 = vmatprep.subr.bf16.mxu0 %v978
    %1010 = vmatpush1.bf16.msra.mxu0 %v977
    %1011 = vmatprep.subr.bf16.mxu0 %v980
    %1012 = vmatpush1.bf16.msra.mxu0 %v979
    %1013 = vmatprep.subr.bf16.mxu0 %v982
    %1014 = vmatpush1.bf16.msra.mxu0 %v981
    %1015 = vmatprep.subr.bf16.mxu0 %v984
    %1016 = vmatpush1.bf16.msra.mxu0 %v983
    %1017 = vmatprep.subr.bf16.mxu0 %v986
    %1018 = vmatpush1.bf16.msra.mxu0 %v985
    %1019 = vmatprep.subr.bf16.mxu0 %v988
    %1020 = vmatpush1.bf16.msra.mxu0 %v987
    %1021 = vmatprep.subr.bf16.mxu0 %v990
    %1022 = vmatpush1.bf16.msra.mxu0 %v989
    %1023 = vmatprep.subr.bf16.mxu0 0
    %1024 = vmatpush1.bf16.msra.mxu0 0
    %1025 = vmatprep.subr.bf16.mxu0 0
    %1026 = vmatpush1.bf16.msra.mxu0 0
    %1027 = vmatprep.subr.bf16.mxu0 0
    %1028 = vmatpush1.bf16.msra.mxu0 0
    %1029 = vmatprep.subr.bf16.mxu0 0
    %1030 = vmatpush1.bf16.msra.mxu0 0
    %1031 = vmatprep.subr.bf16.mxu0 0
    %1032 = vmatpush1.bf16.msra.mxu0 0
    %1033 = vmatprep.subr.bf16.mxu0 0
    %1034 = vmatpush1.bf16.msra.mxu0 0
    %1035 = vmatprep.subr.bf16.mxu0 0
    %1036 = vmatpush1.bf16.msra.mxu0 0
    %1037 = vmatprep.subr.bf16.mxu0 0
    %1038 = vmatpush1.bf16.msra.mxu0 0
    %1039 = vmatprep.mubr.bf16.mxu0 0
    %1040 = vmatmul.mubr.bf16.gmra.mrb[0].mxu0 %v897
    %v1041 = vpop.f32.mrb[0].mxu0
    %v1042 = vadd.f32 %v920, %v1041
    %v1043 = vpop.f32.mrb[0].mxu0
    %v1044 = vadd.f32 %v924, %v1043
    %v1045 = vpop.f32.mrb[0].mxu0
    %v1046 = vpop.f32.mrb[0].mxu0
    %1047 = vdwg.mxu0
    %v1048 = vmax.f32 %v1042, 0.0
    %v1049 = vmax.f32 %v1044, 0.0
    %v1050 = vpack.c.bf16 %v1048, %v1048
    %v1051 = vpack.c.bf16 %v1049, %v1049
    %v1052 = vld [vmem:[#allocation8] sm:$0xf]
    %v1053 = vld [vmem:[#allocation8 + $0x4] sm:$0xf]
    %v1054 = vld [vmem:[#allocation8 + $0x8] sm:$0xf]
    %v1055 = vld [vmem:[#allocation8 + $0xc] sm:$0xf]
    %v1056 = vld [vmem:[#allocation8 + $0x10] sm:$0xf]
    %v1057 = vld [vmem:[#allocation8 + $0x14] sm:$0xf]
    %v1058 = vld [vmem:[#allocation8 + $0x18] sm:$0xf]
    %v1059 = vld [vmem:[#allocation8 + $0x1c] sm:$0xf]
    %v1060 = vld [vmem:[#allocation8 + $0x20] sm:$0xf]
    %v1061 = vld [vmem:[#allocation8 + $0x24] sm:$0xf]
    %v1062 = vld [vmem:[#allocation8 + $0x28] sm:$0xf]
    %v1063 = vld [vmem:[#allocation8 + $0x2c] sm:$0xf]
    %v1064 = vld [vmem:[#allocation8 + $0x30] sm:$0xf]
    %v1065 = vld [vmem:[#allocation8 + $0x34] sm:$0xf]
    %v1066 = vld [vmem:[#allocation8 + $0x38] sm:$0xf]
    %v1067 = vld [vmem:[#allocation8 + $0x3c] sm:$0xf]
    %v1068 = vld [vmem:[#allocation8 + $0x40] sm:$0xf]
    %v1069 = vld [vmem:[#allocation8 + $0x44] sm:$0xf]
    %v1070 = vld [vmem:[#allocation8 + $0x48] sm:$0xf]
    %v1071 = vld [vmem:[#allocation8 + $0x4c] sm:$0xf]
    %v1072 = vld [vmem:[#allocation8 + $0x50] sm:$0xf]
    %v1073 = vld [vmem:[#allocation8 + $0x54] sm:$0xf]
    %v1074 = vld [vmem:[#allocation8 + $0x58] sm:$0xf]
    %v1075 = vld [vmem:[#allocation8 + $0x5c] sm:$0xf]
    %v1076 = vld [vmem:[#allocation8 + $0x60] sm:$0xf]
    %v1077 = vld [vmem:[#allocation8 + $0x64] sm:$0xf]
    %v1078 = vld [vmem:[#allocation8 + $0x68] sm:$0xf]
    %v1079 = vld [vmem:[#allocation8 + $0x6c] sm:$0xf]
    %v1080 = vld [vmem:[#allocation8 + $0x70] sm:$0xf]
    %v1081 = vld [vmem:[#allocation8 + $0x74] sm:$0xf]
    %v1082 = vld [vmem:[#allocation8 + $0x78] sm:$0xf]
    %v1083 = vld [vmem:[#allocation8 + $0x7c] sm:$0xf]
    %v1084 = vld [vmem:[%s4 + $0x3] sm:$0x1]
    %v1085 = vlaneseq
    %v1086 = vshrl.u32 %v1085, 7
    %v1087 = vsub.s32 0, %v1086
    %v1088 = vrot.slane %v1084, %v1087
    %v1121 = vunpack.c.l.b16 %v1052
    %v1122 = vunpack.c.l.b16 %v1053
    %v1123 = vunpack.c.l.b16 %v1054
    %v1124 = vunpack.c.l.b16 %v1055
    %v1125 = vunpack.c.l.b16 %v1056
    %v1126 = vunpack.c.l.b16 %v1057
    %v1127 = vunpack.c.l.b16 %v1058
    %v1128 = vunpack.c.l.b16 %v1059
    %v1129 = vunpack.c.l.b16 %v1060
    %v1130 = vunpack.c.l.b16 %v1061
    %v1131 = vunpack.c.l.b16 %v1062
    %v1132 = vunpack.c.l.b16 %v1063
    %v1133 = vunpack.c.l.b16 %v1064
    %v1134 = vunpack.c.l.b16 %v1065
    %v1135 = vunpack.c.l.b16 %v1066
    %v1136 = vunpack.c.l.b16 %v1067
    %v1137 = vunpack.c.l.b16 %v1068
    %v1138 = vunpack.c.l.b16 %v1069
    %v1139 = vunpack.c.l.b16 %v1070
    %v1140 = vunpack.c.l.b16 %v1071
    %v1141 = vunpack.c.l.b16 %v1072
    %v1142 = vunpack.c.l.b16 %v1073
    %v1143 = vunpack.c.l.b16 %v1074
    %v1144 = vunpack.c.l.b16 %v1075
    %v1145 = vunpack.c.l.b16 %v1076
    %v1146 = vunpack.c.l.b16 %v1077
    %v1147 = vunpack.c.l.b16 %v1078
    %v1148 = vunpack.c.l.b16 %v1079
    %v1149 = vunpack.c.l.b16 %v1080
    %v1150 = vunpack.c.l.b16 %v1081
    %v1151 = vunpack.c.l.b16 %v1082
    %v1152 = vunpack.c.l.b16 %v1083
    %v1153 = vpack.c.b16 %v1122, %v1121
    %v1154 = vpack.c.b16 %v1124, %v1123
    %v1155 = vpack.c.b16 %v1126, %v1125
    %v1156 = vpack.c.b16 %v1128, %v1127
    %v1157 = vpack.c.b16 %v1130, %v1129
    %v1158 = vpack.c.b16 %v1132, %v1131
    %v1159 = vpack.c.b16 %v1134, %v1133
    %v1160 = vpack.c.b16 %v1136, %v1135
    %v1161 = vpack.c.b16 %v1138, %v1137
    %v1162 = vpack.c.b16 %v1140, %v1139
    %v1163 = vpack.c.b16 %v1142, %v1141
    %v1164 = vpack.c.b16 %v1144, %v1143
    %v1165 = vpack.c.b16 %v1146, %v1145
    %v1166 = vpack.c.b16 %v1148, %v1147
    %v1167 = vpack.c.b16 %v1150, %v1149
    %v1168 = vpack.c.b16 %v1152, %v1151
    %1185 = vmatprep.subr.bf16.mxu0 0
    %1186 = vmatpush1.bf16.msra.mxu0 %v1153
    %1187 = vmatprep.subr.bf16.mxu0 0
    %1188 = vmatpush1.bf16.msra.mxu0 %v1154
    %1189 = vmatprep.subr.bf16.mxu0 0
    %1190 = vmatpush1.bf16.msra.mxu0 %v1155
    %1191 = vmatprep.subr.bf16.mxu0 0
    %1192 = vmatpush1.bf16.msra.mxu0 %v1156
    %1193 = vmatprep.subr.bf16.mxu0 0
    %1194 = vmatpush1.bf16.msra.mxu0 %v1157
    %1195 = vmatprep.subr.bf16.mxu0 0
    %1196 = vmatpush1.bf16.msra.mxu0 %v1158
    %1197 = vmatprep.subr.bf16.mxu0 0
    %1198 = vmatpush1.bf16.msra.mxu0 %v1159
    %1199 = vmatprep.subr.bf16.mxu0 0
    %1200 = vmatpush1.bf16.msra.mxu0 %v1160
    %1201 = vmatprep.subr.bf16.mxu0 0
    %1202 = vmatpush1.bf16.msra.mxu0 %v1161
    %1203 = vmatprep.subr.bf16.mxu0 0
    %1204 = vmatpush1.bf16.msra.mxu0 %v1162
    %1205 = vmatprep.subr.bf16.mxu0 0
    %1206 = vmatpush1.bf16.msra.mxu0 %v1163
    %1207 = vmatprep.subr.bf16.mxu0 0
    %1208 = vmatpush1.bf16.msra.mxu0 %v1164
    %1209 = vmatprep.subr.bf16.mxu0 0
    %1210 = vmatpush1.bf16.msra.mxu0 %v1165
    %1211 = vmatprep.subr.bf16.mxu0 0
    %1212 = vmatpush1.bf16.msra.mxu0 %v1166
    %1213 = vmatprep.subr.bf16.mxu0 0
    %1214 = vmatpush1.bf16.msra.mxu0 %v1167
    %1215 = vmatprep.subr.bf16.mxu0 0
    %1216 = vmatpush1.bf16.msra.mxu0 %v1168
    %1217 = vmatprep.mubr.bf16.mxu0 %v1051
    %1218 = vmatmul.mubr.bf16.gmra.mrb[0].mxu0 %v1050
    %v1219 = vpop.f32.mrb[0].mxu0
    %v1220 = vadd.f32 %v1088, %v1219
    %v1221 = vpop.f32.mrb[0].mxu0
    %v1222 = vpop.f32.mrb[0].mxu0
    %v1223 = vpop.f32.mrb[0].mxu0
    %1224 = vdwg.mxu0
    %v1225 = vsel %vm623, %v1220, 0.0
    %1226 = vst [vmem:[#allocation11] sm:$0xff] %v1225
    // Predicated region
    $region38: #{tpu_custom_call.1} parent=1 // pred_check
      _
    $region39: #{tpu_custom_call.1} parent=1 // pred_check_branch
      %1228 = sbr.rel (0) target = $region41
    $region40: #{tpu_custom_call.1} parent=1 // pred_region
      %s1230 = ssub.s32 128, 128
      %1231 = vsyncadd [#allocation4], %s1230
      %s1233 = sshll.u32 [#allocation10], 4
      %s1234 = int_to_ptr.vmem [resolvable:$true] %s1233
      %1236 = dma.vmem_to_hbm [thread:$0]  %s1234, 128, %s5, [#allocation4]
    $region41: #{tpu_custom_call.1} parent=1 // pred_fallthru
      _
    // Predicated region
    $region42: #{tpu_custom_call.1} parent=1 // pred_check
      _
    $region43: #{tpu_custom_call.1} parent=1 // pred_check_branch
      %1238 = sbr.rel (0) target = $region45
    $region44: #{tpu_custom_call.1} parent=1 // pred_region
      %s1240 = ssub.s32 128, 128
      %1241 = vsyncadd [#allocation12], %s1240
      %s1243 = sshll.u32 [#allocation11], 4
      %s1244 = int_to_ptr.vmem [resolvable:$true] %s1243
      %1246 = dma.vmem_to_hbm [thread:$0]  %s1244, 128, %s6, [#allocation12]
    $region45: #{tpu_custom_call.1} parent=1 // pred_fallthru
      _
    // Predicated region
    $region46: #{tpu_custom_call.1} parent=1 // pred_check
      _
    $region47: #{tpu_custom_call.1} parent=1 // pred_check_branch
      %1248 = sbr.rel (0) target = $region49
    $region48: #{tpu_custom_call.1} parent=1 // pred_region
      %1249 = dma.done [#allocation4], 128
    $region49: #{tpu_custom_call.1} parent=1 // pred_fallthru
      _
    // Predicated region
    $region50: #{tpu_custom_call.1} parent=1 // pred_check
      _
    $region51: #{tpu_custom_call.1} parent=1 // pred_check_branch
      %1251 = sbr.rel (0) target = $region53
    $region52: #{tpu_custom_call.1} parent=1 // pred_region
      %1252 = dma.done [#allocation12], 128
    $region53: #{tpu_custom_call.1} parent=1 // pred_fallthru
      _
    %1253 = vsyncpa [#allocation3], 1
    %1254 = vsyncpa [#allocation6], 1
    %1255 = vsyncpa [#allocation9], 1
    %1256 = vsyncpa [#allocation4], 1
    %1257 = vsyncpa [#allocation12], 1

</llo_original>
